<compile_context>
chip_gen: v7x
topology: tpu7x:2x2x1
jax: 0.10.0
libtpu: 0.0.40
codegen_flags: <defaults>
</compile_context>

<pallas_src>
import functools

import jax
import jax.numpy as jnp
from jax import lax
from jax.experimental import pallas as pl
from jax.experimental.pallas import tpu as pltpu


def _round_up(x: int, m: int) -> int:
    return ((x + m - 1) // m) * m


def _plan_tiling(n: int, max_tile_n: int):
    """Pick (n_pad, tile_n).

    Guarantees: tile_n divides n_pad, tile_n <= max(max_tile_n, 128), padding
    waste is < 5*128 samples, grid steps are minimized, and there are >= 2 grid
    steps whenever the data spans more than one 128-lane chunk (so the
    "parallel" grid axis can shard across both v7x TensorCores).
    """
    base_c = max(1, -(-n // 128))             # number of 128-sample chunks
    max_chunks = max(1, max_tile_n // 128)
    if base_c == 1:
        return 128, 128

    best_score = None                          # maximize (-steps, -extra_pad)
    best_pair = (base_c * 128, 128)
    for extra in range(5):                     # allow <= 512 extra padded samples
        c = base_c + extra
        # largest divisor t of c with t <= max_chunks and c // t >= 2
        t_best = 0
        d = 1
        while d * d <= c:
            if c % d == 0:
                for t in (d, c // d):
                    if t <= max_chunks and c // t >= 2:
                        t_best = max(t_best, t)
            d += 1
        if t_best == 0:
            continue
        score = (-(c // t_best), -extra)
        if best_score is None or score > best_score:
            best_score = score
            best_pair = (c * 128, t_best * 128)
    return best_pair


def pol2_kernel(x_ref, wt_ref, bias_ref, out_ref, *, num_introns):
    """One tile of TILE_N samples (samples on the lane axis everywhere).

    x_ref:    (F+1, TILE_N)       x_dtype   features (last row = log library size)
    wt_ref:   (ROWS_W, F+1)       x_dtype   fused weight rows (see wrapper)
    bias_ref: (ROWS_W, 1)         float32   per-row additive constants
    out_ref:  (1+2I, TILE_N)      float32   rows: [exon | reads_i.. | phi_i..]
    """
    I = num_introns

    # Single fused MXU pass: (ROWS_W, F+1) @ (F+1, TILE_N) -> (ROWS_W, TILE_N) f32.
    t = lax.dot_general(wt_ref[...], x_ref[...], (((1,), (0,)), ((), ())),
                        preferred_element_type=jnp.float32)
    b = bias_ref[...]                                           # (ROWS_W, 1)

    # row 0:            intercept_exon            + loglib + X@alpha
    # rows 1..I:        intercept_intron+log_phi0 + loglib + X@(alpha - beta)
    # rows 1+I..2I:     intercept_intron          + loglib + X@(alpha + gamma)
    # rows 1+2I..3I:    log_phi0                           - X@(beta + gamma)
    out_ref[0:1, :] = t[0:1, :] + b[0:1, :]                                    # exon
    out_ref[1:1 + I, :] = (jnp.exp(t[1:1 + I, :] + b[1:1 + I, :]) +
                           jnp.exp(t[1 + I:1 + 2 * I, :] + b[1 + I:1 + 2 * I, :]))
    z = t[1 + 2 * I:1 + 3 * I, :] + b[1 + 2 * I:1 + 3 * I, :]
    out_ref[1 + I:1 + 2 * I, :] = 1.0 / (1.0 + jnp.exp(-z))                    # sigmoid


def pol2_forward(X, log_library_sizes, params, intron_names, *,
                 max_tile_n=32768, x_dtype=jnp.bfloat16):
    """params: 'alpha' (F,), 'intercept_exon' scalar, and per-intron dicts
    'beta'/'gamma' (F,), 'intercept_intron'/'log_phi_zero' scalars."""
    f32 = jnp.float32
    N, F = X.shape
    I = len(intron_names)
    F_aug = F + 1                       # extra column carries log_library_sizes
    rows_w = _round_up(1 + 3 * I, 8)    # matmul / bias rows (sublane-aligned)
    rows_out = 1 + 2 * I                # packed output rows: exon | reads | phi

    alpha = jnp.asarray(params["alpha"], f32)                                        # (F,)
    beta = jnp.stack([jnp.asarray(params["beta"][n], f32) for n in intron_names])    # (I, F)
    gamma = jnp.stack([jnp.asarray(params["gamma"][n], f32) for n in intron_names])  # (I, F)
    intron_int = jnp.stack([jnp.asarray(params["intercept_intron"][n], f32)
                            for n in intron_names])                                  # (I,)
    logphi0 = jnp.stack([jnp.asarray(params["log_phi_zero"][n], f32)
                         for n in intron_names])                                     # (I,)
    exon_int = jnp.asarray(params["intercept_exon"], f32)

    # Fused weight rows (+ loglib column) and per-row bias column.
    wt = jnp.zeros((rows_w, F_aug), f32)
    wt = wt.at[0, :F].set(alpha)
    wt = wt.at[1:1 + I, :F].set(alpha[None, :] - beta)
    wt = wt.at[1 + I:1 + 2 * I, :F].set(alpha[None, :] + gamma)
    wt = wt.at[1 + 2 * I:1 + 3 * I, :F].set(-(beta + gamma))
    wt = wt.at[0:1 + 2 * I, F].set(1.0)         # loglib coeff: 1 on exon/read rows, 0 on phi
    wt = wt.astype(x_dtype)

    bias = jnp.zeros((rows_w, 1), f32)
    bias = bias.at[0, 0].set(exon_int)
    bias = bias.at[1:1 + I, 0].set(intron_int + logphi0)
    bias = bias.at[1 + I:1 + 2 * I, 0].set(intron_int)
    bias = bias.at[1 + 2 * I:1 + 3 * I, 0].set(logphi0)

    # Feature-major X (samples on the lane axis), loglib folded in, cast for HBM.
    ll = jnp.asarray(log_library_sizes, f32).reshape(-1)
    x_aug = jnp.concatenate([jnp.asarray(X, f32), ll[:, None]], axis=1)   # (N, F+1)
    n_pad, tile_n = _plan_tiling(N, max_tile_n)
    x = jnp.pad(x_aug.T.astype(x_dtype), ((0, 0), (0, n_pad - N)))        # (F+1, n_pad)

    grid = (n_pad // tile_n,)
    kernel = functools.partial(pol2_kernel, num_introns=I)
    out = pl.pallas_call(
        kernel,
        out_shape=jax.ShapeDtypeStruct((rows_out, n_pad), f32),
        grid=grid,
        in_specs=[
            pl.BlockSpec((F_aug, tile_n), lambda i: (0, i)),   # X tile (streamed)
            pl.BlockSpec((rows_w, F_aug), lambda i: (0, 0)),   # fused weights (resident)
            pl.BlockSpec((rows_w, 1), lambda i: (0, 0)),       # bias column (resident)
        ],
        out_specs=pl.BlockSpec((rows_out, tile_n), lambda i: (0, i)),
        compiler_params=pltpu.CompilerParams(
            dimension_semantics=("parallel",),
            vmem_limit_bytes=32 * 1024 * 1024,
        ),
    )(x, wt, bias)

    predicted_log_reads_exon = out[0, :N]
    predicted_reads_intron = {n: out[1 + i, :N] for i, n in enumerate(intron_names)}
    phi = {n: out[1 + I + i, :N] for i, n in enumerate(intron_names)}
    return predicted_log_reads_exon, predicted_reads_intron, phi


def pol2_reference(X, loglib, params, intron_names):
    """Pure-JAX reference mirroring the PyTorch forward."""
    ge = X @ params["alpha"]
    exon = params["intercept_exon"] + loglib + ge
    reads, phi = {}, {}
    for n in intron_names:
        speed = X @ params["beta"][n]
        spl = X @ params["gamma"][n]
        phi[n] = jax.nn.sigmoid(params["log_phi_zero"][n] - speed - spl)
        reads[n] = (jnp.exp(params["intercept_intron"][n] + params["log_phi_zero"][n]
                            + loglib + ge - speed)
                    + jnp.exp(params["intercept_intron"][n] + loglib + ge + spl))
    return exon, reads, phi


if __name__ == "__main__":
    N, F = 300, 32                         # non-multiple of 128 -> exercises padding
    intron_names = ["intron_a", "intron_b", "intron_c", "intron_d"]

    key = jax.random.PRNGKey(0)
    keys = jax.random.split(key, 8)
    X = jax.random.normal(keys[0], (N, F), jnp.float32)
    log_library_sizes = jax.random.normal(keys[1], (N,), jnp.float32) * 0.5

    params = {
        "alpha": 0.1 * jax.random.normal(keys[2], (F,), jnp.float32),
        "intercept_exon": jnp.float32(0.25),
        "beta": {n: 0.05 * jax.random.normal(jax.random.fold_in(keys[3], i), (F,), jnp.float32)
                 for i, n in enumerate(intron_names)},
        "gamma": {n: 0.05 * jax.random.normal(jax.random.fold_in(keys[4], i), (F,), jnp.float32)
                  for i, n in enumerate(intron_names)},
        "intercept_intron": {n: jnp.float32(0.1 * (i + 1)) for i, n in enumerate(intron_names)},
        "log_phi_zero": {n: jnp.float32(-0.2 * (i + 1)) for i, n in enumerate(intron_names)},
    }

    exon_ref, reads_ref, phi_ref = pol2_reference(X, log_library_sizes, params, intron_names)

    # 1) f32 X stream, small max_tile_n -> multi-step grid, tight tolerances.
    exon, reads, phi = pol2_forward(X, log_library_sizes, params, intron_names,
                                    max_tile_n=128, x_dtype=jnp.float32)
    jax.block_until_ready((exon, reads, phi))
    assert jnp.allclose(exon, exon_ref, atol=1e-5, rtol=1e-4), "exon mismatch (f32)"
    for n in intron_names:
        assert jnp.allclose(reads[n], reads_ref[n], atol=1e-5, rtol=1e-4), f"reads {n} (f32)"
        assert jnp.allclose(phi[n], phi_ref[n], atol=1e-5, rtol=1e-4), f"phi {n} (f32)"

    # 2) default (bf16 X stream) path: looser tolerances reflect the bf16 HBM stream;
    #    the matmul accumulates and the epilogue runs in f32.
    exon, reads, phi = pol2_forward(X, log_library_sizes, params, intron_names,
                                    max_tile_n=256)
    jax.block_until_ready((exon, reads, phi))
    assert jnp.allclose(exon, exon_ref, atol=5e-2, rtol=5e-2), "exon mismatch (bf16)"
    for n in intron_names:
        assert jnp.allclose(reads[n], reads_ref[n], atol=5e-2, rtol=5e-2), f"reads {n} (bf16)"
        assert jnp.allclose(phi[n], phi_ref[n], atol=5e-2, rtol=5e-2), f"phi {n} (bf16)"

    print("KERNEL_OK")
</pallas_src>

<mosaic_0001>
module attributes {stable_mosaic.version = 11 : i64} {
  func.func @pol2_kernel(%arg0: i32, %arg1: memref<33x128xf32, #tpu.memory_space<vmem>>, %arg2: memref<16x33xf32, #tpu.memory_space<vmem>>, %arg3: memref<16x1xf32, #tpu.memory_space<vmem>>, %arg4: memref<9x128xf32, #tpu.memory_space<vmem>>) attributes {dimension_semantics = [#tpu.dimension_semantics<parallel>], iteration_bounds = array<i64: 3>, scalar_prefetch = 0 : i64, scratch_operands = 0 : i64, tpu.core_type = #tpu.core_type<tc>, window_params = [{transform_indices = @transform_0, window_bounds = array<i64: 33, 128>}, {pipeline_mode = #tpu.pipeline_mode<synchronous>, transform_indices = @transform_1, window_bounds = array<i64: 16, 33>}, {pipeline_mode = #tpu.pipeline_mode<synchronous>, transform_indices = @transform_2, window_bounds = array<i64: 16, 1>}, {transform_indices = @transform_3, window_bounds = array<i64: 9, 128>}]} {
    %c0 = arith.constant 0 : index
    %c0_0 = arith.constant 0 : index
    %0 = vector.load %arg2[%c0, %c0_0] : memref<16x33xf32, #tpu.memory_space<vmem>>, vector<16x33xf32>
    %c0_1 = arith.constant 0 : index
    %c0_2 = arith.constant 0 : index
    %1 = vector.load %arg1[%c0_1, %c0_2] : memref<33x128xf32, #tpu.memory_space<vmem>>, vector<33x128xf32>
    %cst = arith.constant dense<0.000000e+00> : vector<16x128xf32>
    %2 = tpu.matmul %0, %1, %cst {dimension_numbers = #tpu.dot_dimension_numbers<[1], [0], [0], [1], [0, 0, 1, 1], [], []>} : vector<16x33xf32>, vector<33x128xf32>, vector<16x128xf32> -> vector<16x128xf32>
    %c0_3 = arith.constant 0 : index
    %c0_4 = arith.constant 0 : index
    %3 = vector.load %arg3[%c0_3, %c0_4] : memref<16x1xf32, #tpu.memory_space<vmem>>, vector<16x1xf32>
    %4 = vector.extract_strided_slice %2 {offsets = [0, 0], sizes = [1, 128], strides = [1, 1]} : vector<16x128xf32> to vector<1x128xf32>
    %5 = vector.extract_strided_slice %3 {offsets = [0, 0], sizes = [1, 1], strides = [1, 1]} : vector<16x1xf32> to vector<1x1xf32>
    %6 = vector.broadcast %5 : vector<1x1xf32> to vector<1x128xf32>
    %7 = arith.addf %4, %6 : vector<1x128xf32>
    %c0_5 = arith.constant 0 : index
    %c0_6 = arith.constant 0 : index
    %8 = vector.load %arg4[%c0_5, %c0_6] : memref<9x128xf32, #tpu.memory_space<vmem>>, vector<1x128xf32>
    tpu.vector_store %arg4[%c0_5, %c0_6], %7 {strides = array<i32>} : memref<9x128xf32, #tpu.memory_space<vmem>>, vector<1x128xf32>,
    %9 = vector.extract_strided_slice %2 {offsets = [1, 0], sizes = [4, 128], strides = [1, 1]} : vector<16x128xf32> to vector<4x128xf32>
    %10 = vector.extract_strided_slice %3 {offsets = [1, 0], sizes = [4, 1], strides = [1, 1]} : vector<16x1xf32> to vector<4x1xf32>
    %11 = vector.broadcast %10 : vector<4x1xf32> to vector<4x128xf32>
    %12 = arith.addf %9, %11 : vector<4x128xf32>
    %13 = math.exp %12 : vector<4x128xf32>
    %14 = vector.extract_strided_slice %2 {offsets = [5, 0], sizes = [4, 128], strides = [1, 1]} : vector<16x128xf32> to vector<4x128xf32>
    %15 = vector.extract_strided_slice %3 {offsets = [5, 0], sizes = [4, 1], strides = [1, 1]} : vector<16x1xf32> to vector<4x1xf32>
    %16 = vector.broadcast %15 : vector<4x1xf32> to vector<4x128xf32>
    %17 = arith.addf %14, %16 : vector<4x128xf32>
    %18 = math.exp %17 : vector<4x128xf32>
    %19 = arith.addf %13, %18 : vector<4x128xf32>
    %c1 = arith.constant 1 : index
    %c0_7 = arith.constant 0 : index
    %20 = vector.load %arg4[%c1, %c0_7] : memref<9x128xf32, #tpu.memory_space<vmem>>, vector<4x128xf32>
    tpu.vector_store %arg4[%c1, %c0_7], %19 {strides = array<i32>} : memref<9x128xf32, #tpu.memory_space<vmem>>, vector<4x128xf32>,
    %21 = vector.extract_strided_slice %2 {offsets = [9, 0], sizes = [4, 128], strides = [1, 1]} : vector<16x128xf32> to vector<4x128xf32>
    %22 = vector.extract_strided_slice %3 {offsets = [9, 0], sizes = [4, 1], strides = [1, 1]} : vector<16x1xf32> to vector<4x1xf32>
    %23 = vector.broadcast %22 : vector<4x1xf32> to vector<4x128xf32>
    %24 = arith.addf %21, %23 : vector<4x128xf32>
    %cst_8 = arith.constant 0.000000e+00 : f32
    %25 = vector.broadcast %cst_8 : f32 to vector<4x128xf32>
    %26 = arith.subf %25, %24 : vector<4x128xf32>
    %27 = math.exp %26 : vector<4x128xf32>
    %cst_9 = arith.constant 1.000000e+00 : f32
    %28 = vector.broadcast %cst_9 : f32 to vector<4x128xf32>
    %29 = arith.addf %28, %27 : vector<4x128xf32>
    %cst_10 = arith.constant 1.000000e+00 : f32
    %30 = vector.broadcast %cst_10 : f32 to vector<4x128xf32>
    %31 = arith.divf %30, %29 : vector<4x128xf32>
    %c5 = arith.constant 5 : index
    %c0_11 = arith.constant 0 : index
    %32 = vector.load %arg4[%c5, %c0_11] : memref<9x128xf32, #tpu.memory_space<vmem>>, vector<4x128xf32>
    tpu.vector_store %arg4[%c5, %c0_11], %31 {strides = array<i32>} : memref<9x128xf32, #tpu.memory_space<vmem>>, vector<4x128xf32>,
    return
  }
  func.func @transform_0(%arg0: i32) -> (i32, i32) {
    %c0_i32 = arith.constant 0 : i32
    %c0_i32_0 = arith.constant 0 : i32
    return %c0_i32, %arg0 : i32, i32
  }
  func.func @transform_1(%arg0: i32) -> (i32, i32) {
    %c0_i32 = arith.constant 0 : i32
    %c0_i32_0 = arith.constant 0 : i32
    %c0_i32_1 = arith.constant 0 : i32
    return %c0_i32, %c0_i32_0 : i32, i32
  }
  func.func @transform_2(%arg0: i32) -> (i32, i32) {
    %c0_i32 = arith.constant 0 : i32
    %c0_i32_0 = arith.constant 0 : i32
    %c0_i32_1 = arith.constant 0 : i32
    return %c0_i32, %c0_i32_0 : i32, i32
  }
  func.func @transform_3(%arg0: i32) -> (i32, i32) {
    %c0_i32 = arith.constant 0 : i32
    %c0_i32_0 = arith.constant 0 : i32
    return %c0_i32, %arg0 : i32, i32
  }
}

</mosaic_0001>

<llo_original>
// kernel: tpu_custom_call.1
$region0: #{tpu_custom_call.1}
  #allocation0 [shape = 'u32[]', space=smem, size = 0x4, offset = 0x4, fixed_abs, tag = 'smem constant byte address 0x4 - core index']
  #allocation1 [shape = 'u32[144,128]{1,0:T(1,128)}', space=vmem, size = 0x12000, scoped, tag = 'internal scratch']
  %s0 = inlined_call_operand.hbm [shape: f32[33,384], index: 0, kind: input, shape index: {}]
  %s1 = inlined_call_operand.vmem [shape: f32[16,33], index: 1, kind: input, shape index: {}]
  %s2 = inlined_call_operand.vmem [shape: f32[16,1], index: 2, kind: input, shape index: {}]
  %s3 = inlined_call_operand.hbm [shape: f32[9,384], index: 3, kind: output, shape index: {}]
  %s4 = sld [smem:[#allocation0]]
  $region49: #{tpu_custom_call.1} parent=0
    _
  %s6 = ssub.s32 1, %s4
  %s7 = scalar_select 0, %s6, %s4
  $region1: #{tpu_custom_call.1} parent=0
    #allocation2 [shape = 'u8[40960]{0}', space=vmem, size = 0xa000, scoped, tag = 'input window, operand 0']
    #allocation3 [shape = 's32[2]{0}', space=sflag, size = 0x8, scoped, tag = 'scoped memory for tpu_custom_call.1']
    #allocation4 [shape = 's32[2]{0}', space=sflag, size = 0x8, scoped, tag = 'scoped memory for tpu_custom_call.1']
    #allocation5 [shape = 'u8[16384]{0}', space=vmem, size = 0x4000, scoped, tag = 'output window, operand 0']
    %8 = vsyncpa [#allocation3], 0
    %s9 = scalar_lea.sflag [#allocation3], 1
    %10 = vsyncpa %s9, 0
    %11 = vsyncpa [#allocation4], 0
    %s12 = scalar_lea.sflag [#allocation4], 1
    %13 = vsyncpa %s12, 0
    loop: start=0, step=1, limit=5
    $region2: #{tpu_custom_call.1} parent=1 // loop_pre_header
      _
    $region3: #{tpu_custom_call.1} parent=1 // loop_header
      %s15 = sphi 0, %s19
      %p16 = scmp.ge.s32.totalorder %s15, 5
      %s25 = sphi 0, %s27
      %s28 = sphi 0, %s25
      %s29 = sphi 0, %s28
      %s45 = sphi 0, %s29
      %s49 = sphi 0, %s49
      %s51 = sphi 0, %s49
      %s52 = sphi 0, %s51
      %s66 = sphi 0, %s52
      %s70 = sphi 0, %s70
      %s72 = sphi 0, %s70
      %s73 = sphi 0, %s72
      %s87 = sphi 0, %s73
      %s93 = sphi 0, %s95
      %s96 = sphi 0, %s93
      %s97 = sphi 0, %s96
      %s113 = sphi 0, %s97
    $region4: #{tpu_custom_call.1} parent=1 // loop_header_branch
      %18 = sbr.rel (%p16) target = $region8
    $region5: #{tpu_custom_call.1} parent=1 // loop_body
      %s20 = ssub.s32 %s15, 1
      %s21 = ssub.s32 %s15, 2
      %s22 = sadd.s32 %s15, 1
      %s23 = ssub.s32 %s15, %s22
      %p24 = scmp.eq.s32.totalorder %s23, 0
      %s26 = sadd.s32 %s25, 1
      %s27 = scalar_select %p24, %s25, %s26
      %p30 = pneg %p24
      %p31 = scmp.eq.s32.totalorder %s15, 2
      %p32 = por %p30, %p31
      %p33 = scmp.ne.s32.totalorder %s25, %s28
      %p34 = scmp.eq.s32.totalorder %s15, 0
      %p35 = por %p33, %p34
      %p36 = scmp.ne.s32.totalorder %s25, %s28
      %p37 = scmp.eq.s32.totalorder %s20, 2
      %p38 = por %p36, %p37
      %p39 = scmp.ne.s32.totalorder %s28, %s29
      %p40 = scmp.eq.s32.totalorder %s20, 0
      %p41 = por %p39, %p40
      %p42 = scmp.ne.s32.totalorder %s28, %s29
      %p43 = scmp.eq.s32.totalorder %s21, 2
      %p44 = por %p42, %p43
      %p46 = scmp.ne.s32.totalorder %s29, %s45
      %p47 = scmp.eq.s32.totalorder %s21, 0
      %p48 = por %p46, %p47
      %s50 = sadd.s32 %s49, 1
      %p53 = scmp.eq.s32.totalorder %s15, 2
      %p54 = scmp.ne.s32.totalorder %s49, %s51
      %p55 = scmp.eq.s32.totalorder %s15, 0
      %p56 = por %p54, %p55
      %p57 = scmp.ne.s32.totalorder %s49, %s51
      %p58 = scmp.eq.s32.totalorder %s20, 2
      %p59 = por %p57, %p58
      %p60 = scmp.ne.s32.totalorder %s51, %s52
      %p61 = scmp.eq.s32.totalorder %s20, 0
      %p62 = por %p60, %p61
      %p63 = scmp.ne.s32.totalorder %s51, %s52
      %p64 = scmp.eq.s32.totalorder %s21, 2
      %p65 = por %p63, %p64
      %p67 = scmp.ne.s32.totalorder %s52, %s66
      %p68 = scmp.eq.s32.totalorder %s21, 0
      %p69 = por %p67, %p68
      %s71 = sadd.s32 %s70, 1
      %p74 = scmp.eq.s32.totalorder %s15, 2
      %p75 = scmp.ne.s32.totalorder %s70, %s72
      %p76 = scmp.eq.s32.totalorder %s15, 0
      %p77 = por %p75, %p76
      %p78 = scmp.ne.s32.totalorder %s70, %s72
      %p79 = scmp.eq.s32.totalorder %s20, 2
      %p80 = por %p78, %p79
      %p81 = scmp.ne.s32.totalorder %s72, %s73
      %p82 = scmp.eq.s32.totalorder %s20, 0
      %p83 = por %p81, %p82
      %p84 = scmp.ne.s32.totalorder %s72, %s73
      %p85 = scmp.eq.s32.totalorder %s21, 2
      %p86 = por %p84, %p85
      %p88 = scmp.ne.s32.totalorder %s73, %s87
      %p89 = scmp.eq.s32.totalorder %s21, 0
      %p90 = por %p88, %p89
      %s91 = ssub.s32 %s15, %s22
      %p92 = scmp.eq.s32.totalorder %s91, 0
      %s94 = sadd.s32 %s93, 1
      %s95 = scalar_select %p92, %s93, %s94
      %p98 = pneg %p92
      %p99 = scmp.eq.s32.totalorder %s15, 2
      %p100 = por %p98, %p99
      %p101 = scmp.ne.s32.totalorder %s93, %s96
      %p102 = scmp.eq.s32.totalorder %s15, 0
      %p103 = por %p101, %p102
      %p104 = scmp.ne.s32.totalorder %s93, %s96
      %p105 = scmp.eq.s32.totalorder %s20, 2
      %p106 = por %p104, %p105
      %p107 = scmp.ne.s32.totalorder %s96, %s97
      %p108 = scmp.eq.s32.totalorder %s20, 0
      %p109 = por %p107, %p108
      %p110 = scmp.ne.s32.totalorder %s96, %s97
      %p111 = scmp.eq.s32.totalorder %s21, 2
      %p112 = por %p110, %p111
      %p114 = scmp.ne.s32.totalorder %s97, %s113
      %p115 = scmp.eq.s32.totalorder %s21, 0
      %p116 = por %p114, %p115
      %p117 = scmp.le.s32.totalorder 1, %s15
      %p118 = scmp.lt.s32.totalorder %s15, 4
      %p119 = pnand %p117, %p118
      %p120 = pneg %p119
      // Predicated region
      $region9: #{tpu_custom_call.1} parent=5 // pred_check
        _
      $region10: #{tpu_custom_call.1} parent=5 // pred_check_branch
        %122 = sbr.rel (%p119) target = $region12
      $region11: #{tpu_custom_call.1} parent=5 // pred_region
        %s123 = ssub.s32 %s15, 1
        // Predicated region
        $region13: #{tpu_custom_call.1} parent=11 // pred_check
          %p124 = pneg %p62
        $region14: #{tpu_custom_call.1} parent=11 // pred_check_branch
          %126 = sbr.rel (%p124) target = $region16
        $region15: #{tpu_custom_call.1} parent=11 // pred_region
          _
        $region16: #{tpu_custom_call.1} parent=11 // pred_fallthru
          _
        // Predicated region
        $region17: #{tpu_custom_call.1} parent=11 // pred_check
          %p127 = pneg %p83
        $region18: #{tpu_custom_call.1} parent=11 // pred_check_branch
          %129 = sbr.rel (%p127) target = $region20
        $region19: #{tpu_custom_call.1} parent=11 // pred_region
          _
        $region20: #{tpu_custom_call.1} parent=11 // pred_fallthru
          _
      $region12: #{tpu_custom_call.1} parent=5 // pred_fallthru
        _
      %p130 = scmp.lt.s32.totalorder %s15, 3
      // Predicated region
      $region21: #{tpu_custom_call.1} parent=5 // pred_check
        %p131 = pneg %p130
      $region22: #{tpu_custom_call.1} parent=5 // pred_check_branch
        %133 = sbr.rel (%p131) target = $region24
      $region23: #{tpu_custom_call.1} parent=5 // pred_region
        // Predicated region
        $region25: #{tpu_custom_call.1} parent=23 // pred_check
          %p134 = pneg %p35
        $region26: #{tpu_custom_call.1} parent=23 // pred_check_branch
          %136 = sbr.rel (%p134) target = $region28
        $region27: #{tpu_custom_call.1} parent=23 // pred_region
          %s137 = sand.u32 %s25, 1
          %s138 = scalar_lea.sflag [#allocation3], %s137
          %s139 = sand.u32 %s25, 1
          %s140 = smul.addr %s139, 40
          %s141 = scalar_lea.vmem [#allocation2], %s140
          %s143 = ssub.s32 640, 640
          %144 = vsyncadd %s138, %s143
          %s145 = smul.addr %s15, 128
          %s146 = scalar_lea.hbm %s0, %s145
          %s147 = sshll.u32 %s141, 4
          %s148 = int_to_ptr.vmem [resolvable:$true] %s147
          %153 = dma.hbm_to_vmem [thread:$0]  %s146, 640, %s148, %s138, 384, 128, 8
        $region28: #{tpu_custom_call.1} parent=23 // pred_fallthru
          _
      $region24: #{tpu_custom_call.1} parent=5 // pred_fallthru
        _
      %p154 = scmp.le.s32.totalorder 1, %s15
      %p155 = scmp.lt.s32.totalorder %s15, 4
      %p156 = pnand %p154, %p155
      %p157 = pneg %p156
      // Predicated region
      $region29: #{tpu_custom_call.1} parent=5 // pred_check
        _
      $region30: #{tpu_custom_call.1} parent=5 // pred_check_branch
        %159 = sbr.rel (%p156) target = $region32
      $region31: #{tpu_custom_call.1} parent=5 // pred_region
        %s160 = ssub.s32 %s15, 1
        %s161 = sand.u32 %s28, 1
        %s162 = scalar_lea.sflag [#allocation3], %s161
        %s163 = sand.u32 %s28, 1
        %s164 = smul.addr %s163, 40
        %s165 = scalar_lea.vmem [#allocation2], %s164
        // Predicated region
        $region33: #{tpu_custom_call.1} parent=31 // pred_check
          %p166 = pneg %p41
        $region34: #{tpu_custom_call.1} parent=31 // pred_check_branch
          %168 = sbr.rel (%p166) target = $region36
        $region35: #{tpu_custom_call.1} parent=31 // pred_region
          %169 = dma.done %s162, 640
        $region36: #{tpu_custom_call.1} parent=31 // pred_fallthru
          _
        %s170 = sand.u32 %s28, 1
        %s171 = scalar_lea.sflag [#allocation3], %s170
        %s172 = sand.u32 %s28, 1
        %s173 = smul.addr %s172, 40
        %s174 = scalar_lea.vmem [#allocation2], %s173
        %p175 = pneg %p41
        %p176 = pneg %p38
        %p177 = pneg %p62
        %p178 = pneg %p59
        %p179 = pneg %p83
        %p180 = pneg %p80
        %p181 = pneg %p109
        %p182 = pneg %p106
        %s183 = sand.u32 %s96, 1
        %s184 = scalar_lea.sflag [#allocation4], %s183
        %s185 = sand.u32 %s96, 1
        %s186 = smul.addr %s185, 16
        %s187 = scalar_lea.vmem [#allocation5], %s186
        %v188 = vld [vmem:[%s1] sm:$0xff]
        %v189 = vld [vmem:[%s1 + $0x8] sm:$0xff]
        %v190 = vld [vmem:[%s165] sm:$0xff]
        %v191 = vld [vmem:[%s165 + $0x8] sm:$0xff]
        %v192 = vld [vmem:[%s165 + $0x10] sm:$0xff]
        %v193 = vld [vmem:[%s165 + $0x18] sm:$0xff]
        %v194 = vld [vmem:[%s165 + $0x20] sm:$0x1]
        %vm195 = vcmask 269312
        %v197 = vsel %vm195, %v188, 0
        %v200 = vsel %vm195, %v189, 0
        %vm202 = vcmask 1040384
        %v204 = vsel %vm202, %v194, 0
        %206 = vmatprep.subr.mxu0 0.0
        %207 = vmatpush1.msra.mxu0 %v190
        %208 = vmatprep.subr.mxu0 0.0
        %209 = vmatpush1.msra.mxu0 %v191
        %210 = vmatprep.subr.mxu0 0.0
        %211 = vmatpush1.msra.mxu0 %v192
        %212 = vmatprep.subr.mxu0 0.0
        %213 = vmatpush1.msra.mxu0 %v193
        %214 = vmatprep.subr.mxu0 0.0
        %215 = vmatpush1.msra.mxu0 %v204
        %216 = vmatprep.subr.mxu0 0.0
        %217 = vmatpush1.msra.mxu0 0.0
        %218 = vmatprep.subr.mxu0 0.0
        %219 = vmatpush1.msra.mxu0 0.0
        %220 = vmatprep.subr.mxu0 0.0
        %221 = vmatpush1.msra.mxu0 0.0
        %222 = vmatprep.subr.mxu0 0.0
        %223 = vmatpush1.msra.mxu0 0.0
        %224 = vmatprep.subr.mxu0 0.0
        %225 = vmatpush1.msra.mxu0 0.0
        %226 = vmatprep.subr.mxu0 0.0
        %227 = vmatpush1.msra.mxu0 0.0
        %228 = vmatprep.subr.mxu0 0.0
        %229 = vmatpush1.msra.mxu0 0.0
        %230 = vmatprep.subr.mxu0 0.0
        %231 = vmatpush1.msra.mxu0 0.0
        %232 = vmatprep.subr.mxu0 0.0
        %233 = vmatpush1.msra.mxu0 0.0
        %234 = vmatprep.subr.mxu0 0.0
        %235 = vmatpush1.msra.mxu0 0.0
        %236 = vmatprep.subr.mxu0 0.0
        %237 = vmatpush1.msra.mxu0 0.0
        %238 = vmatprep.subr.mxu0 0.0
        %239 = vmatpush1.msra.mxu0 0.0
        %240 = vmatprep.subr.mxu0 0.0
        %241 = vmatpush1.msra.mxu0 0.0
        %242 = vmatprep.subr.mxu0 0.0
        %243 = vmatpush1.msra.mxu0 0.0
        %244 = vmatprep.subr.mxu0 0.0
        %245 = vmatpush1.msra.mxu0 0.0
        %246 = vmatprep.subr.mxu0 0.0
        %247 = vmatpush1.msra.mxu0 0.0
        %248 = vmatprep.subr.mxu0 0.0
        %249 = vmatpush1.msra.mxu0 0.0
        %250 = vmatprep.subr.mxu0 0.0
        %251 = vmatpush1.msra.mxu0 0.0
        %252 = vmatprep.subr.mxu0 0.0
        %253 = vmatpush1.msra.mxu0 0.0
        %254 = vmatprep.subr.mxu0 0.0
        %255 = vmatpush1.msra.mxu0 0.0
        %256 = vmatprep.subr.mxu0 0.0
        %257 = vmatpush1.msra.mxu0 0.0
        %258 = vmatprep.subr.mxu0 0.0
        %259 = vmatpush1.msra.mxu0 0.0
        %260 = vmatprep.subr.mxu0 0.0
        %261 = vmatpush1.msra.mxu0 0.0
        %262 = vmatprep.subr.mxu0 0.0
        %263 = vmatpush1.msra.mxu0 0.0
        %264 = vmatprep.subr.mxu0 0.0
        %265 = vmatpush1.msra.mxu0 0.0
        %266 = vmatprep.subr.mxu0 0.0
        %267 = vmatpush1.msra.mxu0 0.0
        %268 = vmatprep.subr.mxu0 0.0
        %269 = vmatpush1.msra.mxu0 0.0
        %270 = vmatprep.mubr.f32.mxu0 0.0
        %271 = vmatmul.mubr.f32.gmra.mrb[0].mxu0 %v197
        %v272 = vpop.f32.mrb[0].mxu0
        %v273 = vadd.f32 0.0, %v272
        %v274 = vpop.f32.mrb[0].mxu0
        %275 = vmatprep.mubr.f32.mxu0 0.0
        %276 = vmatmul.mubr.f32.gmra.mrb[0].mxu0 %v200
        %v277 = vpop.f32.mrb[0].mxu0
        %v278 = vadd.f32 0.0, %v277
        %v279 = vpop.f32.mrb[0].mxu0
        %280 = vdwg.mxu0
        %v281 = vld [vmem:[%s2] sm:$0xff]
        %v282 = vld [vmem:[%s2 + $0x8] sm:$0xff]
        %284 = vset.pattern.permute.xlu0 0
        %285 = vperm.xlu0 %284, %v281
        %v286 = vpop.permute.xlu0 %285
        %v288 = vadd.f32 %v273, %v286
        %289 = vst [vmem:[%s187] sm:$0x1] %v288
        %v290 = vmul.f32 %v288, 1.442695
        %v291 = vpow.pop %v290
        %293 = vset.pattern.permute.xlu0 0
        %294 = vperm.xlu0 %293, %v282
        %v295 = vpop.permute.xlu0 %294
        %v297 = vadd.f32 %v278, %v295
        %v298 = vmul.f32 %v297, 1.442695
        %v299 = vpow.pop %v298
        %vm302 = vcmask 1043456
        %v303 = vrot.slane %v291, 4
        %v304 = vrot.slane %v299, 4
        %v305 = vsel %vm302, %v303, %v304
        %v307 = vadd.f32 %v291, %v305
        %308 = vst [vmem:[%s187] sm:$0x1e] %v307
        %v309 = vsub.f32 0.0, %v297
        %v310 = vmul.f32 %v309, 1.442695
        %v311 = vpow.pop %v310
        %v312 = vadd.f32 %v311, 1.0
        %v313 = vrcp.pop %v312
        %v314 = vmul.f32 1.0, %v313
        %315 = vst [vmem:[%s187 + $0x4] sm:$0x1e] %v314
        %s316 = sand.u32 %s96, 1
        %s317 = scalar_lea.sflag [#allocation4], %s316
        %s318 = sand.u32 %s96, 1
        %s319 = smul.addr %s318, 16
        %s320 = scalar_lea.vmem [#allocation5], %s319
        // Predicated region
        $region37: #{tpu_custom_call.1} parent=31 // pred_check
          %p321 = pneg %p106
        $region38: #{tpu_custom_call.1} parent=31 // pred_check_branch
          %323 = sbr.rel (%p321) target = $region40
        $region39: #{tpu_custom_call.1} parent=31 // pred_region
          %s325 = ssub.s32 256, 256
          %326 = vsyncadd %s317, %s325
          %s327 = smul.addr %s20, 128
          %s328 = scalar_lea.hbm %s3, %s327
          %s329 = sshll.u32 %s320, 4
          %s330 = int_to_ptr.vmem [resolvable:$true] %s329
          %335 = dma.vmem_to_hbm [thread:$0]  %s330, 256, %s328, %s317, 128, 384, 8
        $region40: #{tpu_custom_call.1} parent=31 // pred_fallthru
          _
      $region32: #{tpu_custom_call.1} parent=5 // pred_fallthru
        _
      %p336 = scmp.le.s32.totalorder 2, %s15
      // Predicated region
      $region41: #{tpu_custom_call.1} parent=5 // pred_check
        %p337 = pneg %p336
      $region42: #{tpu_custom_call.1} parent=5 // pred_check_branch
        %339 = sbr.rel (%p337) target = $region44
      $region43: #{tpu_custom_call.1} parent=5 // pred_region
        %s340 = ssub.s32 %s15, 2
        // Predicated region
        $region45: #{tpu_custom_call.1} parent=43 // pred_check
          %p341 = pneg %p112
        $region46: #{tpu_custom_call.1} parent=43 // pred_check_branch
          %343 = sbr.rel (%p341) target = $region48
        $region47: #{tpu_custom_call.1} parent=43 // pred_region
          %s344 = sand.u32 %s97, 1
          %s345 = scalar_lea.sflag [#allocation4], %s344
          %s346 = sand.u32 %s97, 1
          %s347 = smul.addr %s346, 16
          %s348 = scalar_lea.vmem [#allocation5], %s347
          %349 = dma.done %s345, 256
        $region48: #{tpu_custom_call.1} parent=43 // pred_fallthru
          _
      $region44: #{tpu_custom_call.1} parent=5 // pred_fallthru
        _
    $region6: #{tpu_custom_call.1} parent=1 // loop_footer
      %s19 = sadd.s32 1, %s15
    $region7: #{tpu_custom_call.1} parent=1 // loop_footer_branch
      %14 = sbr.rel target = $region3
    $region8: #{tpu_custom_call.1} parent=1 // loop_exit
      _
    %350 = vsyncpa [#allocation3], 1
    %s351 = scalar_lea.sflag [#allocation3], 1
    %352 = vsyncpa %s351, 1
    %353 = vsyncpa [#allocation4], 1
    %s354 = scalar_lea.sflag [#allocation4], 1
    %355 = vsyncpa %s354, 1

</llo_original>
